<compile_context>
chip_gen: v6e
topology: v6e:2x2x1
jax: 0.10.0
libtpu: 0.0.40
codegen_flags: <defaults>
</compile_context>

<pallas_src>
import jax
import jax.numpy as jnp
from jax import lax
from jax.experimental import pallas as pl
from jax.experimental.pallas import tpu as pltpu

_EPS = 1e-5  # nn.BatchNorm1d default eps (affine=False, track_running_stats=False)


def _vmem_limit_bytes():
    """Generation-aware scoped-VMEM limit (v5e/v6e: 128 MiB phys, v7x: 64 MiB/TC)."""
    try:
        cap = int(pltpu.get_tpu_info().vmem_capacity_bytes)
    except Exception:
        cap = 64 << 20  # conservative default (v7x per-TensorCore)
    return min(int(cap * 0.75), 100 << 20)


def _pick_tile(n, candidates):
    """Largest candidate dividing n, else n itself (block == full dim is legal)."""
    for c in candidates:
        if n % c == 0:
            return c
    return n


def _pick_td(d, tk, budget):
    """Feature tile: 128-aligned, up to 1024, prefers >=2 feature tiles (keeps
    both v7x TensorCores busy via the parallel i/j axes), and keeps the f32
    accumulator plus double-buffered bf16 operand blocks inside the budget."""
    def fits(c):
        acc = c * c * 4                  # (td, td) f32 accumulator
        bufs = 2 * 2 * tk * c * 2        # 2 operands x 2 pipeline buffers x bf16
        return acc + bufs <= budget

    for c in (1024, 512, 256, 128):
        if d % c == 0 and d // c >= 2 and fits(c):
            return c
    for c in (1024, 512, 256, 128):
        if d % c == 0 and fits(c):
            return c
    # TODO(synk): pad D to a multiple of 128 (with masking of the padded
    # diagonal entries) for awkward feature dims; as-is a large prime-ish D
    # falls back to a full-D tile.
    return d


def _normalize(feats1, feats2, tc, vmem_limit):
    """Fused BatchNorm1d(affine=False) for both views in one pass.

    Per feature-column block (B, tc): mean, two-pass biased variance computed
    on the VMEM-resident block (no one-pass cancellation), then emit
    z = (x - mean) * rsqrt(var + eps) once as bf16 (MXU-native operands)."""
    b, d = feats1.shape
    nc = d // tc

    def kernel(f1_ref, f2_ref, z1_ref, z2_ref):
        inv_b = 1.0 / float(f1_ref.shape[0])  # static Python float

        def norm(x):
            xf = x.astype(jnp.float32)
            m = jnp.sum(xf, axis=0, keepdims=True) * inv_b
            c = xf - m
            var = jnp.sum(c * c, axis=0, keepdims=True) * inv_b  # biased var
            return (c * lax.rsqrt(var + _EPS)).astype(jnp.bfloat16)

        z1_ref[...] = norm(f1_ref[...])
        z2_ref[...] = norm(f2_ref[...])

    return pl.pallas_call(
        kernel,
        grid=(nc,),
        in_specs=[
            pl.BlockSpec((b, tc), lambda c: (0, c)),
            pl.BlockSpec((b, tc), lambda c: (0, c)),
        ],
        out_specs=(
            pl.BlockSpec((b, tc), lambda c: (0, c)),
            pl.BlockSpec((b, tc), lambda c: (0, c)),
        ),
        out_shape=(
            jax.ShapeDtypeStruct((b, d), jnp.bfloat16),
            jax.ShapeDtypeStruct((b, d), jnp.bfloat16),
        ),
        compiler_params=pltpu.CompilerParams(
            dimension_semantics=("parallel",),
            vmem_limit_bytes=vmem_limit,
        ),
    )(feats1, feats2)


def _xcorr_loss(z1, z2, *, penalty, weight, td, tk, vmem_limit):
    b, d = z1.shape
    ni = d // td
    nk = b // tk

    # Closure constants are plain Python floats (NOT traced arrays), so they
    # become literals in the kernel trace instead of captured constants.
    inv_b = 1.0 / float(b)
    penalty_f = float(penalty)
    # Per-tile scalar contribution is splatted over its (8,128) output block and
    # the wrapper sums everything, so pre-divide by 8*128 (exact: power of two).
    scale = float(weight) / (float(d) * 8.0 * 128.0)

    def kernel(z1_ref, z2_ref, out_ref, acc_ref):
        k = pl.program_id(2)
        last_k = pl.num_programs(2) - 1

        @pl.when(k == 0)
        def _():
            acc_ref[...] = jnp.zeros_like(acc_ref)

        # (td, td) += z1_tile.T @ z2_tile -- bf16 MXU operands, f32 accumulation.
        acc_ref[...] += lax.dot_general(
            z1_ref[...], z2_ref[...], (((0,), (0,)), ((), ())),
            preferred_element_type=jnp.float32)

        ti = pl.program_id(0)
        tj = pl.program_id(1)

        # Off-diagonal tile: every element is off-diagonal -> penalty * sum(c^2).
        @pl.when(jnp.logical_and(k == last_k, ti != tj))
        def _():
            c = acc_ref[...] * inv_b
            val = penalty_f * jnp.sum(c * c, keepdims=True)
            out_ref[...] = jnp.broadcast_to(val * scale, (8, 128))

        # Diagonal tile: diagonal elements use (c-1)^2, the rest penalty * c^2.
        @pl.when(jnp.logical_and(k == last_k, ti == tj))
        def _():
            c = acc_ref[...] * inv_b
            r = lax.broadcasted_iota(jnp.int32, (td, td), 0)
            q = lax.broadcasted_iota(jnp.int32, (td, td), 1)
            contrib = jnp.where(r == q, (c - 1.0) ** 2, penalty_f * c * c)
            val = jnp.sum(contrib, keepdims=True)
            out_ref[...] = jnp.broadcast_to(val * scale, (8, 128))

    cost = pl.CostEstimate(
        flops=2 * b * d * d,
        transcendentals=0,
        # Real DMA traffic: z1 is re-read once per j tile, z2 once per i tile
        # (both bf16), plus the tiny splat output.
        bytes_accessed=2 * ni * b * d * 2 + ni * ni * 8 * 128 * 4,
    )

    out = pl.pallas_call(
        kernel,
        out_shape=jax.ShapeDtypeStruct((ni * 8, ni * 128), jnp.float32),
        grid_spec=pltpu.PrefetchScalarGridSpec(
            num_scalar_prefetch=0,
            grid=(ni, ni, nk),
            in_specs=[
                pl.BlockSpec((tk, td), lambda i, j, k: (k, i)),  # z1 block
                pl.BlockSpec((tk, td), lambda i, j, k: (k, j)),  # z2 block
            ],
            out_specs=pl.BlockSpec((8, 128), lambda i, j, k: (i, j)),
            scratch_shapes=[pltpu.VMEM((td, td), jnp.float32)],
        ),
        compiler_params=pltpu.CompilerParams(
            dimension_semantics=("parallel", "parallel", "arbitrary"),
            vmem_limit_bytes=vmem_limit,
        ),
        cost_estimate=cost,
    )(z1, z2)

    # Tiny (ni*8, ni*128) array of splatted per-tile contributions; a plain sum
    # (done by XLA outside the kernel) recovers the exact loss.
    return jnp.sum(out)


def make_barlow_twins_loss(off_diag_penalty: float, loss_weight: float = 1.0):
    """Returns a callable (feats1, feats2) -> scalar Barlow Twins loss, Pallas-backed."""
    penalty = float(off_diag_penalty)
    weight = float(loss_weight)

    def loss_fn(feats1, feats2):
        assert feats1.shape == feats2.shape and feats1.ndim == 2
        b, d = feats1.shape

        vmem_limit = _vmem_limit_bytes()
        budget = int(vmem_limit * 0.6)   # leave pipeline / compiler headroom

        # Batch (contraction) tile: multiples of 16 (bf16 sublane packing) or full B.
        tk = _pick_tile(b, (1024, 512, 256, 128, 64, 32, 16))
        # Feature tile: VMEM-budget- and parallelism-aware.
        td = _pick_td(d, tk, budget)

        # Normalize-pass column tile: large lane-dense block, shrink if the
        # double-buffered (B, tc) input blocks plus bf16 outputs blow the budget.
        tc = _pick_tile(d, (2048, 1024, 512, 256, 128))
        itemsize = jnp.dtype(feats1.dtype).itemsize
        while b * tc * (2 * 2 * itemsize + 2 * 2 * 2) > budget and tc % 256 == 0:
            tc //= 2

        z1, z2 = _normalize(feats1, feats2, tc, vmem_limit)
        return _xcorr_loss(z1, z2, penalty=penalty, weight=weight,
                           td=td, tk=tk, vmem_limit=vmem_limit)

    return loss_fn


def _reference_loss(feats1, feats2, penalty, loss_weight=1.0, eps=_EPS):
    """Pure-JAX f32 reference mirroring the PyTorch module."""
    f1 = feats1.astype(jnp.float32)
    f2 = feats2.astype(jnp.float32)
    b, d = f1.shape
    z1 = (f1 - f1.mean(0)) / jnp.sqrt(f1.var(0) + eps)
    z2 = (f2 - f2.mean(0)) / jnp.sqrt(f2.var(0) + eps)
    eccm = (z1.T @ z2) / b
    on = jnp.sum((jnp.diag(eccm) - 1.0) ** 2)
    off = jnp.sum(eccm ** 2) - jnp.sum(jnp.diag(eccm) ** 2)
    return loss_weight * (on + penalty * off) / d


if __name__ == "__main__":
    key = jax.random.PRNGKey(0)
    k1, k2, k3, k4 = jax.random.split(key, 4)

    off_diag_penalty = 5e-3
    loss_weight = 1.0
    loss_fn = jax.jit(make_barlow_twins_loss(off_diag_penalty, loss_weight))

    # Tolerances account for the bf16 normalized-activation materialization
    # (MXU-native operands); accumulation stays f32.
    RTOL = ATOL = 1e-2

    # Case 1: small shape, single-tile fallback path (D < 128, one k step).
    b1, d1 = 8, 32
    a1 = jax.random.normal(k1, (b1, d1), dtype=jnp.float32)
    a2 = jax.random.normal(k2, (b1, d1), dtype=jnp.float32)
    loss1 = jax.block_until_ready(loss_fn(a1, a2))
    ref1 = _reference_loss(a1, a2, off_diag_penalty, loss_weight)
    assert jnp.allclose(loss1, ref1, rtol=RTOL, atol=ATOL), (loss1, ref1)

    # Case 2: real tiled path: 3x3 feature-tile grid (diagonal and off-diagonal
    # tiles) with the VMEM accumulator and bf16 z operands.
    b2, d2 = 24, 384
    c1 = jax.random.normal(k3, (b2, d2), dtype=jnp.float32)
    c2 = jax.random.normal(k4, (b2, d2), dtype=jnp.float32)
    loss2 = jax.block_until_ready(loss_fn(c1, c2))
    ref2 = _reference_loss(c1, c2, off_diag_penalty, loss_weight)
    assert jnp.allclose(loss2, ref2, rtol=RTOL, atol=ATOL), (loss2, ref2)

    print("KERNEL_OK")
</pallas_src>

<mosaic_0001>
module attributes {stable_mosaic.version = 11 : i64} {
  func.func @kernel(%arg0: i32, %arg1: memref<8x32xf32, #tpu.memory_space<vmem>>, %arg2: memref<8x32xf32, #tpu.memory_space<vmem>>, %arg3: memref<8x32xbf16, #tpu.memory_space<vmem>>, %arg4: memref<8x32xbf16, #tpu.memory_space<vmem>>) attributes {dimension_semantics = [#tpu.dimension_semantics<parallel>], iteration_bounds = array<i64: 1>, scalar_prefetch = 0 : i64, scratch_operands = 0 : i64, tpu.core_type = #tpu.core_type<tc>, window_params = [{transform_indices = @transform_0, window_bounds = array<i64: 8, 32>}, {transform_indices = @transform_1, window_bounds = array<i64: 8, 32>}, {transform_indices = @transform_2, window_bounds = array<i64: 8, 32>}, {transform_indices = @transform_3, window_bounds = array<i64: 8, 32>}]} {
    %c0 = arith.constant 0 : index
    %c0_0 = arith.constant 0 : index
    %0 = vector.load %arg1[%c0, %c0_0] : memref<8x32xf32, #tpu.memory_space<vmem>>, vector<8x32xf32>
    %cst = arith.constant dense<0.000000e+00> : vector<32xf32>
    %1 = vector.multi_reduction <add>, %0, %cst [0] : vector<8x32xf32> to vector<32xf32>
    %2 = vector.shape_cast %1 : vector<32xf32> to vector<1x32xf32>
    %cst_1 = arith.constant 1.250000e-01 : f32
    %3 = vector.broadcast %cst_1 : f32 to vector<1x32xf32>
    %4 = arith.mulf %2, %3 : vector<1x32xf32>
    %5 = vector.broadcast %4 : vector<1x32xf32> to vector<8x32xf32>
    %6 = arith.subf %0, %5 : vector<8x32xf32>
    %7 = arith.mulf %6, %6 : vector<8x32xf32>
    %cst_2 = arith.constant dense<0.000000e+00> : vector<32xf32>
    %8 = vector.multi_reduction <add>, %7, %cst_2 [0] : vector<8x32xf32> to vector<32xf32>
    %9 = vector.shape_cast %8 : vector<32xf32> to vector<1x32xf32>
    %cst_3 = arith.constant 1.250000e-01 : f32
    %10 = vector.broadcast %cst_3 : f32 to vector<1x32xf32>
    %11 = arith.mulf %9, %10 : vector<1x32xf32>
    %cst_4 = arith.constant 9.99999974E-6 : f32
    %12 = vector.broadcast %cst_4 : f32 to vector<1x32xf32>
    %13 = arith.addf %11, %12 : vector<1x32xf32>
    %14 = math.rsqrt %13 : vector<1x32xf32>
    %15 = vector.broadcast %14 : vector<1x32xf32> to vector<8x32xf32>
    %16 = arith.mulf %6, %15 : vector<8x32xf32>
    %17 = arith.truncf %16 : vector<8x32xf32> to vector<8x32xbf16>
    %c0_5 = arith.constant 0 : index
    %c0_6 = arith.constant 0 : index
    %18 = vector.load %arg3[%c0_5, %c0_6] : memref<8x32xbf16, #tpu.memory_space<vmem>>, vector<8x32xbf16>
    tpu.vector_store %arg3[%c0_5, %c0_6], %17 {strides = array<i32>} : memref<8x32xbf16, #tpu.memory_space<vmem>>, vector<8x32xbf16>,
    %c0_7 = arith.constant 0 : index
    %c0_8 = arith.constant 0 : index
    %19 = vector.load %arg2[%c0_7, %c0_8] : memref<8x32xf32, #tpu.memory_space<vmem>>, vector<8x32xf32>
    %cst_9 = arith.constant dense<0.000000e+00> : vector<32xf32>
    %20 = vector.multi_reduction <add>, %19, %cst_9 [0] : vector<8x32xf32> to vector<32xf32>
    %21 = vector.shape_cast %20 : vector<32xf32> to vector<1x32xf32>
    %cst_10 = arith.constant 1.250000e-01 : f32
    %22 = vector.broadcast %cst_10 : f32 to vector<1x32xf32>
    %23 = arith.mulf %21, %22 : vector<1x32xf32>
    %24 = vector.broadcast %23 : vector<1x32xf32> to vector<8x32xf32>
    %25 = arith.subf %19, %24 : vector<8x32xf32>
    %26 = arith.mulf %25, %25 : vector<8x32xf32>
    %cst_11 = arith.constant dense<0.000000e+00> : vector<32xf32>
    %27 = vector.multi_reduction <add>, %26, %cst_11 [0] : vector<8x32xf32> to vector<32xf32>
    %28 = vector.shape_cast %27 : vector<32xf32> to vector<1x32xf32>
    %cst_12 = arith.constant 1.250000e-01 : f32
    %29 = vector.broadcast %cst_12 : f32 to vector<1x32xf32>
    %30 = arith.mulf %28, %29 : vector<1x32xf32>
    %cst_13 = arith.constant 9.99999974E-6 : f32
    %31 = vector.broadcast %cst_13 : f32 to vector<1x32xf32>
    %32 = arith.addf %30, %31 : vector<1x32xf32>
    %33 = math.rsqrt %32 : vector<1x32xf32>
    %34 = vector.broadcast %33 : vector<1x32xf32> to vector<8x32xf32>
    %35 = arith.mulf %25, %34 : vector<8x32xf32>
    %36 = arith.truncf %35 : vector<8x32xf32> to vector<8x32xbf16>
    %c0_14 = arith.constant 0 : index
    %c0_15 = arith.constant 0 : index
    %37 = vector.load %arg4[%c0_14, %c0_15] : memref<8x32xbf16, #tpu.memory_space<vmem>>, vector<8x32xbf16>
    tpu.vector_store %arg4[%c0_14, %c0_15], %36 {strides = array<i32>} : memref<8x32xbf16, #tpu.memory_space<vmem>>, vector<8x32xbf16>,
    return
  }
  func.func @transform_0(%arg0: i32) -> (i32, i32) {
    %c0_i32 = arith.constant 0 : i32
    %c0_i32_0 = arith.constant 0 : i32
    return %c0_i32, %arg0 : i32, i32
  }
  func.func @transform_1(%arg0: i32) -> (i32, i32) {
    %c0_i32 = arith.constant 0 : i32
    %c0_i32_0 = arith.constant 0 : i32
    return %c0_i32, %arg0 : i32, i32
  }
  func.func @transform_2(%arg0: i32) -> (i32, i32) {
    %c0_i32 = arith.constant 0 : i32
    %c0_i32_0 = arith.constant 0 : i32
    return %c0_i32, %arg0 : i32, i32
  }
  func.func @transform_3(%arg0: i32) -> (i32, i32) {
    %c0_i32 = arith.constant 0 : i32
    %c0_i32_0 = arith.constant 0 : i32
    return %c0_i32, %arg0 : i32, i32
  }
}

module attributes {stable_mosaic.version = 11 : i64} {
  func.func @kernel(%arg0: i32, %arg1: i32, %arg2: i32, %arg3: memref<8x32xbf16, #tpu.memory_space<vmem>>, %arg4: memref<8x32xbf16, #tpu.memory_space<vmem>>, %arg5: memref<8x128xf32, #tpu.memory_space<vmem>>, %arg6: memref<32x32xf32, #tpu.memory_space<vmem>>) attributes {dimension_semantics = [#tpu.dimension_semantics<parallel>, #tpu.dimension_semantics<parallel>, #tpu.dimension_semantics<arbitrary>], iteration_bounds = array<i64: 1, 1, 1>, scalar_prefetch = 0 : i64, scratch_operands = 1 : i64, tpu.core_type = #tpu.core_type<tc>, window_params = [{transform_indices = @transform_0, window_bounds = array<i64: 8, 32>}, {transform_indices = @transform_1, window_bounds = array<i64: 8, 32>}, {transform_indices = @transform_2, window_bounds = array<i64: 8, 128>}]} {
    %c0_i32 = arith.constant 0 : i32
    %0 = arith.cmpi eq, %arg2, %c0_i32 : i32
    %1 = arith.extui %0 : i1 to i32
    %c0_i32_0 = arith.constant 0 : i32
    %2 = arith.cmpi ne, %1, %c0_i32_0 : i32
    scf.if %2 {
      %cst_12 = arith.constant 0.000000e+00 : f32
      %19 = vector.broadcast %cst_12 : f32 to vector<32x32xf32>
      %c0_13 = arith.constant 0 : index
      %c0_14 = arith.constant 0 : index
      %20 = vector.load %arg6[%c0_13, %c0_14] : memref<32x32xf32, #tpu.memory_space<vmem>>, vector<32x32xf32>
      tpu.vector_store %arg6[%c0_13, %c0_14], %19 {strides = array<i32>} : memref<32x32xf32, #tpu.memory_space<vmem>>, vector<32x32xf32>,
    } else {
    }
    %c0 = arith.constant 0 : index
    %c0_1 = arith.constant 0 : index
    %3 = vector.load %arg6[%c0, %c0_1] : memref<32x32xf32, #tpu.memory_space<vmem>>, vector<32x32xf32>
    %c0_2 = arith.constant 0 : index
    %c0_3 = arith.constant 0 : index
    %4 = vector.load %arg3[%c0_2, %c0_3] : memref<8x32xbf16, #tpu.memory_space<vmem>>, vector<8x32xbf16>
    %c0_4 = arith.constant 0 : index
    %c0_5 = arith.constant 0 : index
    %5 = vector.load %arg4[%c0_4, %c0_5] : memref<8x32xbf16, #tpu.memory_space<vmem>>, vector<8x32xbf16>
    %cst = arith.constant dense<0.000000e+00> : vector<32x32xf32>
    %6 = tpu.matmul %4, %5, %cst {dimension_numbers = #tpu.dot_dimension_numbers<[0], [0], [1], [1], [0, 1, 1, 1], [], []>} : vector<8x32xbf16>, vector<8x32xbf16>, vector<32x32xf32> -> vector<32x32xf32>
    %7 = arith.addf %3, %6 : vector<32x32xf32>
    %c0_6 = arith.constant 0 : index
    %c0_7 = arith.constant 0 : index
    %8 = vector.load %arg6[%c0_6, %c0_7] : memref<32x32xf32, #tpu.memory_space<vmem>>, vector<32x32xf32>
    tpu.vector_store %arg6[%c0_6, %c0_7], %7 {strides = array<i32>} : memref<32x32xf32, #tpu.memory_space<vmem>>, vector<32x32xf32>,
    %c0_i32_8 = arith.constant 0 : i32
    %9 = arith.cmpi eq, %arg2, %c0_i32_8 : i32
    %10 = arith.cmpi ne, %arg0, %arg1 : i32
    %11 = arith.andi %9, %10 : i1
    %12 = arith.extui %11 : i1 to i32
    %c0_i32_9 = arith.constant 0 : i32
    %13 = arith.cmpi ne, %12, %c0_i32_9 : i32
    scf.if %13 {
      %c0_12 = arith.constant 0 : index
      %c0_13 = arith.constant 0 : index
      %19 = vector.load %arg6[%c0_12, %c0_13] : memref<32x32xf32, #tpu.memory_space<vmem>>, vector<32x32xf32>
      %cst_14 = arith.constant 1.250000e-01 : f32
      %20 = vector.broadcast %cst_14 : f32 to vector<32x32xf32>
      %21 = arith.mulf %19, %20 : vector<32x32xf32>
      %22 = arith.mulf %21, %21 : vector<32x32xf32>
      %23 = vector.shape_cast %22 : vector<32x32xf32> to vector<1x32x32xf32>
      %cst_15 = arith.constant dense<0.000000e+00> : vector<1xf32>
      %24 = vector.multi_reduction <add>, %23, %cst_15 [1, 2] : vector<1x32x32xf32> to vector<1xf32>
      %25 = vector.shape_cast %24 : vector<1xf32> to vector<1x1x1xf32>
      %26 = vector.extract %25[0, 0, 0] : f32 from vector<1x1x1xf32>
      %27 = vector.broadcast %26 : f32 to vector<1x1xf32>
      %cst_16 = arith.constant 5.000000e-03 : f32
      %28 = vector.broadcast %cst_16 : f32 to vector<1x1xf32>
      %29 = arith.mulf %28, %27 : vector<1x1xf32>
      %cst_17 = arith.constant 3.05175781E-5 : f32
      %30 = vector.broadcast %cst_17 : f32 to vector<1x1xf32>
      %31 = arith.mulf %29, %30 : vector<1x1xf32>
      %32 = vector.shape_cast %31 : vector<1x1xf32> to vector<1x1xf32>
      %33 = vector.broadcast %32 : vector<1x1xf32> to vector<8x128xf32>
      %c0_18 = arith.constant 0 : index
      %c0_19 = arith.constant 0 : index
      %34 = vector.load %arg5[%c0_18, %c0_19] : memref<8x128xf32, #tpu.memory_space<vmem>>, vector<8x128xf32>
      tpu.vector_store %arg5[%c0_18, %c0_19], %33 {strides = array<i32>} : memref<8x128xf32, #tpu.memory_space<vmem>>, vector<8x128xf32>,
    } else {
    }
    %c0_i32_10 = arith.constant 0 : i32
    %14 = arith.cmpi eq, %arg2, %c0_i32_10 : i32
    %15 = arith.cmpi eq, %arg0, %arg1 : i32
    %16 = arith.andi %14, %15 : i1
    %17 = arith.extui %16 : i1 to i32
    %c0_i32_11 = arith.constant 0 : i32
    %18 = arith.cmpi ne, %17, %c0_i32_11 : i32
    scf.if %18 {
      %c0_12 = arith.constant 0 : index
      %c0_13 = arith.constant 0 : index
      %19 = vector.load %arg6[%c0_12, %c0_13] : memref<32x32xf32, #tpu.memory_space<vmem>>, vector<32x32xf32>
      %cst_14 = arith.constant 1.250000e-01 : f32
      %20 = vector.broadcast %cst_14 : f32 to vector<32x32xf32>
      %21 = arith.mulf %19, %20 : vector<32x32xf32>
      %22 = tpu.iota {dimensions = array<i32: 0>} : vector<32x32xi32>
      %23 = tpu.iota {dimensions = array<i32: 1>} : vector<32x32xi32>
      %24 = arith.cmpi eq, %22, %23 : vector<32x32xi32>
      %cst_15 = arith.constant 1.000000e+00 : f32
      %25 = vector.broadcast %cst_15 : f32 to vector<32x32xf32>
      %26 = arith.subf %21, %25 : vector<32x32xf32>
      %27 = arith.mulf %26, %26 : vector<32x32xf32>
      %cst_16 = arith.constant 5.000000e-03 : f32
      %28 = vector.broadcast %cst_16 : f32 to vector<32x32xf32>
      %29 = arith.mulf %28, %21 : vector<32x32xf32>
      %30 = arith.mulf %29, %21 : vector<32x32xf32>
      %31 = arith.select %24, %27, %30 : vector<32x32xi1>, vector<32x32xf32>
      %32 = vector.shape_cast %31 : vector<32x32xf32> to vector<1x32x32xf32>
      %cst_17 = arith.constant dense<0.000000e+00> : vector<1xf32>
      %33 = vector.multi_reduction <add>, %32, %cst_17 [1, 2] : vector<1x32x32xf32> to vector<1xf32>
      %34 = vector.shape_cast %33 : vector<1xf32> to vector<1x1x1xf32>
      %35 = vector.extract %34[0, 0, 0] : f32 from vector<1x1x1xf32>
      %36 = vector.broadcast %35 : f32 to vector<1x1xf32>
      %cst_18 = arith.constant 3.05175781E-5 : f32
      %37 = vector.broadcast %cst_18 : f32 to vector<1x1xf32>
      %38 = arith.mulf %36, %37 : vector<1x1xf32>
      %39 = vector.shape_cast %38 : vector<1x1xf32> to vector<1x1xf32>
      %40 = vector.broadcast %39 : vector<1x1xf32> to vector<8x128xf32>
      %c0_19 = arith.constant 0 : index
      %c0_20 = arith.constant 0 : index
      %41 = vector.load %arg5[%c0_19, %c0_20] : memref<8x128xf32, #tpu.memory_space<vmem>>, vector<8x128xf32>
      tpu.vector_store %arg5[%c0_19, %c0_20], %40 {strides = array<i32>} : memref<8x128xf32, #tpu.memory_space<vmem>>, vector<8x128xf32>,
    } else {
    }
    return
  }
  func.func @transform_0(%arg0: i32, %arg1: i32, %arg2: i32) -> (i32, i32) {
    %c0_i32 = arith.constant 0 : i32
    return %arg2, %arg0 : i32, i32
  }
  func.func @transform_1(%arg0: i32, %arg1: i32, %arg2: i32) -> (i32, i32) {
    %c0_i32 = arith.constant 0 : i32
    return %arg2, %arg1 : i32, i32
  }
  func.func @transform_2(%arg0: i32, %arg1: i32, %arg2: i32) -> (i32, i32) {
    %c0_i32 = arith.constant 0 : i32
    return %arg0, %arg1 : i32, i32
  }
}

</mosaic_0001>

<llo_original>
// kernel: loss_fn.2
$region0: #{loss_fn.2}
  #allocation0 [shape = 'u32[]', space=smem, size = 0x4, offset = 0x4, fixed_abs, tag = 'smem constant byte address 0x4 - core index']
  #allocation1 [shape = 'u32[144,128]{1,0:T(1,128)}', space=vmem, size = 0x12000, scoped, tag = 'internal scratch']
  %s0 = inlined_call_operand.hbm [shape: f32[8,32], index: 0, kind: input, shape index: {}]
  %s1 = inlined_call_operand.hbm [shape: f32[8,32], index: 1, kind: input, shape index: {}]
  %s2 = inlined_call_operand.vmem [shape: bf16[8,32], index: 2, kind: output, shape index: {0}]
  %s3 = inlined_call_operand.vmem [shape: bf16[8,32], index: 3, kind: output, shape index: {1}]
  %4 = xla_tuple %s2, %s3
  %s5 = sld [smem:[#allocation0]]
  $region34: #{loss_fn.2} parent=0
    _
  %s7 = ssub.s32 1, %s5
  %s8 = scalar_select 0, %s7, %s5
  $region1: #{loss_fn.2} parent=0
    #allocation2 [shape = 'u8[4096]{0}', space=vmem, size = 0x1000, scoped, tag = 'input window, operand 0, single buffered']
    #allocation3 [shape = 's32[1]{0}', space=sflag, size = 0x4, scoped, tag = 'scoped memory for loss_fn.2']
    #allocation4 [shape = 'u8[4096]{0}', space=vmem, size = 0x1000, scoped, tag = 'input window, operand 1, single buffered']
    #allocation5 [shape = 's32[1]{0}', space=sflag, size = 0x4, scoped, tag = 'scoped memory for loss_fn.2']
    %9 = vsyncpa [#allocation3], 0
    %10 = vsyncpa [#allocation5], 0
    // Predicated region
    $region2: #{loss_fn.2} parent=1 // pred_check
      _
    $region3: #{loss_fn.2} parent=1 // pred_check_branch
      %12 = sbr.rel (0) target = $region5
    $region4: #{loss_fn.2} parent=1 // pred_region
      %s14 = ssub.s32 128, 128
      %15 = vsyncadd [#allocation3], %s14
      %s17 = sshll.u32 [#allocation2], 4
      %s18 = int_to_ptr.vmem [resolvable:$true] %s17
      %20 = dma.hbm_to_vmem [thread:$0]  %s0, 128, %s18, [#allocation3]
    $region5: #{loss_fn.2} parent=1 // pred_fallthru
      _
    // Predicated region
    $region6: #{loss_fn.2} parent=1 // pred_check
      _
    $region7: #{loss_fn.2} parent=1 // pred_check_branch
      %22 = sbr.rel (0) target = $region9
    $region8: #{loss_fn.2} parent=1 // pred_region
      %s24 = ssub.s32 128, 128
      %25 = vsyncadd [#allocation5], %s24
      %s27 = sshll.u32 [#allocation4], 4
      %s28 = int_to_ptr.vmem [resolvable:$true] %s27
      %30 = dma.hbm_to_vmem [thread:$0]  %s1, 128, %s28, [#allocation5]
    $region9: #{loss_fn.2} parent=1 // pred_fallthru
      _
    // Predicated region
    $region10: #{loss_fn.2} parent=1 // pred_check
      _
    $region11: #{loss_fn.2} parent=1 // pred_check_branch
      %32 = sbr.rel (0) target = $region13
    $region12: #{loss_fn.2} parent=1 // pred_region
      %33 = dma.done [#allocation3], 128
    $region13: #{loss_fn.2} parent=1 // pred_fallthru
      _
    // Predicated region
    $region14: #{loss_fn.2} parent=1 // pred_check
      _
    $region15: #{loss_fn.2} parent=1 // pred_check_branch
      %35 = sbr.rel (0) target = $region17
    $region16: #{loss_fn.2} parent=1 // pred_region
      %36 = dma.done [#allocation5], 128
    $region17: #{loss_fn.2} parent=1 // pred_fallthru
      _
    %v37 = vld [vmem:[#allocation2] sm:$0xff]
    %vm38 = vcmask 261120
    %v39 = vsel %vm38, %v37, 0.0
    %v40 = vrot.slane %v39, 4
    %v41 = vadd.f32 %v39, %v40
    %v42 = vrot.slane %v41, 2
    %v43 = vadd.f32 %v41, %v42
    %v44 = vrot.slane %v43, 1
    %v45 = vadd.f32 %v43, %v44
    %v46 = vmul.f32 %v45, 0.125
    %v47 = vsub.f32 %v37, %v46
    %v48 = vmul.f32 %v47, %v47
    %v49 = vsel %vm38, %v48, 0.0
    %v50 = vrot.slane %v49, 4
    %v51 = vadd.f32 %v49, %v50
    %v52 = vrot.slane %v51, 2
    %v53 = vadd.f32 %v51, %v52
    %v54 = vrot.slane %v53, 1
    %v55 = vadd.f32 %v53, %v54
    %v56 = vmul.f32 %v55, 0.125
    %v57 = vadd.f32 %v56, 1e-05
    %v58 = vrsqrt.pop %v57
    %v59 = vmul.f32 %v47, %v58
    %v60 = vpack.c.bf16 %v59, %v59
    %vm61 = vcmask 257024
    %62 = vst.msk [vmem:[%s2] sm:$0xf] %vm61, %v60
    %v63 = vld [vmem:[#allocation4] sm:$0xff]
    %v64 = vsel %vm38, %v63, 0.0
    %v65 = vrot.slane %v64, 4
    %v66 = vadd.f32 %v64, %v65
    %v67 = vrot.slane %v66, 2
    %v68 = vadd.f32 %v66, %v67
    %v69 = vrot.slane %v68, 1
    %v70 = vadd.f32 %v68, %v69
    %v71 = vmul.f32 %v70, 0.125
    %v72 = vsub.f32 %v63, %v71
    %v73 = vmul.f32 %v72, %v72
    %v74 = vsel %vm38, %v73, 0.0
    %v75 = vrot.slane %v74, 4
    %v76 = vadd.f32 %v74, %v75
    %v77 = vrot.slane %v76, 2
    %v78 = vadd.f32 %v76, %v77
    %v79 = vrot.slane %v78, 1
    %v80 = vadd.f32 %v78, %v79
    %v81 = vmul.f32 %v80, 0.125
    %v82 = vadd.f32 %v81, 1e-05
    %v83 = vrsqrt.pop %v82
    %v84 = vmul.f32 %v72, %v83
    %v85 = vpack.c.bf16 %v84, %v84
    %86 = vst.msk [vmem:[%s3] sm:$0xf] %vm61, %v85
    // Predicated region
    $region18: #{loss_fn.2} parent=1 // pred_check
      _
    $region19: #{loss_fn.2} parent=1 // pred_check_branch
      %88 = sbr.rel (0) target = $region21
    $region20: #{loss_fn.2} parent=1 // pred_region
      _
    $region21: #{loss_fn.2} parent=1 // pred_fallthru
      _
    // Predicated region
    $region22: #{loss_fn.2} parent=1 // pred_check
      _
    $region23: #{loss_fn.2} parent=1 // pred_check_branch
      %90 = sbr.rel (0) target = $region25
    $region24: #{loss_fn.2} parent=1 // pred_region
      _
    $region25: #{loss_fn.2} parent=1 // pred_fallthru
      _
    // Predicated region
    $region26: #{loss_fn.2} parent=1 // pred_check
      _
    $region27: #{loss_fn.2} parent=1 // pred_check_branch
      %92 = sbr.rel (0) target = $region29
    $region28: #{loss_fn.2} parent=1 // pred_region
      _
    $region29: #{loss_fn.2} parent=1 // pred_fallthru
      _
    // Predicated region
    $region30: #{loss_fn.2} parent=1 // pred_check
      _
    $region31: #{loss_fn.2} parent=1 // pred_check_branch
      %94 = sbr.rel (0) target = $region33
    $region32: #{loss_fn.2} parent=1 // pred_region
      _
    $region33: #{loss_fn.2} parent=1 // pred_fallthru
      _
    %95 = vsyncpa [#allocation3], 1
    %96 = vsyncpa [#allocation5], 1

// kernel: loss_fn.3
$region0: #{loss_fn.3}
  #allocation0 [shape = 'u32[]', space=smem, size = 0x4, offset = 0x4, fixed_abs, tag = 'smem constant byte address 0x4 - core index']
  #allocation1 [shape = 'u32[144,128]{1,0:T(1,128)}', space=vmem, size = 0x12000, scoped, tag = 'internal scratch']
  #allocation2 [shape = 'f32[32,32]{1,0:T(8,128)}', space=vmem, size = 0x4000, scoped, tag = 'scratch operand']
  %s0 = inlined_call_operand.vmem [shape: bf16[8,32], index: 0, kind: input, shape index: {}]
  %s1 = inlined_call_operand.vmem [shape: bf16[8,32], index: 1, kind: input, shape index: {}]
  %s2 = inlined_call_operand.vmem [shape: f32[8,128], index: 2, kind: output, shape index: {}]
  %s3 = sld [smem:[#allocation0]]
  $region30: #{loss_fn.3} parent=0
    _
  %s5 = ssub.s32 1, %s3
  %s6 = scalar_select 0, %s5, %s3
  // Predicated region
  $region2: #{loss_fn.3} parent=0 // pred_check
    _
  $region3: #{loss_fn.3} parent=0 // pred_check_branch
    %8 = sbr.rel (0) target = $region5
  $region4: #{loss_fn.3} parent=0 // pred_region
    _
  $region5: #{loss_fn.3} parent=0 // pred_fallthru
    _
  // Predicated region
  $region6: #{loss_fn.3} parent=0 // pred_check
    _
  $region7: #{loss_fn.3} parent=0 // pred_check_branch
    %10 = sbr.rel (0) target = $region9
  $region8: #{loss_fn.3} parent=0 // pred_region
    _
  $region9: #{loss_fn.3} parent=0 // pred_fallthru
    _
  %p12 = scmp.eq.s32.totalorder 0, 0
  // Predicated region
  $region10: #{loss_fn.3} parent=0 // pred_check
    %p13 = pneg %p12
  $region11: #{loss_fn.3} parent=0 // pred_check_branch
    %15 = sbr.rel (%p13) target = $region13
  $region12: #{loss_fn.3} parent=0 // pred_region
    %vm16 = vcmask 261120
    %17 = vst.msk [vmem:[#allocation2] sm:$0xff] %vm16, 0.0
    %18 = vst.msk [vmem:[#allocation2 + $0x8] sm:$0xff] %vm16, 0.0
    %19 = vst.msk [vmem:[#allocation2 + $0x10] sm:$0xff] %vm16, 0.0
    %20 = vst.msk [vmem:[#allocation2 + $0x18] sm:$0xff] %vm16, 0.0
  $region13: #{loss_fn.3} parent=0 // pred_fallthru
    _
  %v21 = vld [vmem:[#allocation2] sm:$0xff]
  %v22 = vld [vmem:[#allocation2 + $0x8] sm:$0xff]
  %v23 = vld [vmem:[#allocation2 + $0x10] sm:$0xff]
  %v24 = vld [vmem:[#allocation2 + $0x18] sm:$0xff]
  %v25 = vld [vmem:[%s0] sm:$0xf]
  %v26 = vld [vmem:[%s1] sm:$0xf]
  %27 = vxpose.xlu0.c.b16.start [1/8] %v25, 128
  %28 = vxpose.xlu0.c.b16.cont [2/8] 0, 128
  %29 = vxpose.xlu0.c.b16.cont [3/8] 0, 128
  %30 = vxpose.xlu0.c.b16.cont [4/8] 0, 128
  %31 = vxpose.xlu0.c.b16.cont [5/8] 0, 128
  %32 = vxpose.xlu0.c.b16.cont [6/8] 0, 128
  %33 = vxpose.xlu0.c.b16.cont [7/8] 0, 128
  %34 = vxpose.xlu0.c.b16.end [8/8] 0, 128
  %v35 = vpop.trf.xlu0
  %v36 = vpop.trf.xlu0
  %v37 = vpop.trf.xlu0
  %v38 = vpop.trf.xlu0
  %v39 = vpop.trf.xlu0
  %v40 = vpop.trf.xlu0
  %v41 = vpop.trf.xlu0
  %v42 = vpop.trf.xlu0
  %vm43 = vcmask 64512
  %v45 = vsel %vm43, %v35, 0
  %v48 = vsel %vm43, %v36, 0
  %vm50 = vcmask 1043456
  %v52 = vsel %vm50, %v26, 0
  %54 = vmatprep.subr.bf16.mxu0 0
  %55 = vmatpush1.bf16.msra.mxu0 0
  %56 = vmatprep.subr.bf16.mxu0 0
  %57 = vmatpush1.bf16.msra.mxu0 0
  %58 = vmatprep.subr.bf16.mxu0 0
  %59 = vmatpush1.bf16.msra.mxu0 0
  %60 = vmatprep.subr.bf16.mxu0 0
  %61 = vmatpush1.bf16.msra.mxu0 0
  %62 = vmatprep.subr.bf16.mxu0 0
  %63 = vmatpush1.bf16.msra.mxu0 0
  %64 = vmatprep.subr.bf16.mxu0 0
  %65 = vmatpush1.bf16.msra.mxu0 0
  %66 = vmatprep.subr.bf16.mxu0 0
  %67 = vmatpush1.bf16.msra.mxu0 0
  %68 = vmatprep.subr.bf16.mxu0 0
  %69 = vmatpush1.bf16.msra.mxu0 %v52
  %70 = vmatprep.subr.bf16.mxu0 0
  %71 = vmatpush2.bf16.msra.mxu0 0
  %72 = vmatprep.subr.bf16.mxu0 0
  %73 = vmatpush2.bf16.msra.mxu0 0
  %74 = vmatprep.subr.bf16.mxu0 0
  %75 = vmatpush2.bf16.msra.mxu0 0
  %76 = vmatprep.subr.bf16.mxu0 0
  %77 = vmatpush2.bf16.msra.mxu0 0
  %78 = vmatprep.subr.bf16.mxu0 0
  %79 = vmatpush2.bf16.msra.mxu0 0
  %80 = vmatprep.subr.bf16.mxu0 0
  %81 = vmatpush2.bf16.msra.mxu0 0
  %82 = vmatprep.subr.bf16.mxu0 0
  %83 = vmatpush2.bf16.msra.mxu0 0
  %84 = vmatprep.subr.bf16.mxu0 0
  %85 = vmatpush2.bf16.msra.mxu0 0
  %86 = vmatprep.mubr.bf16.mxu0 0
  %87 = vmatmul.mubr.bf16.gmra.mxu0 %v45
  %v88 = vpop.f32.mrf.mxu0
  %v89 = vadd.f32 0.0, %v88
  %v90 = vpop.f32.mrf.mxu0
  %v91 = vpop.f32.mrf.mxu0
  %v92 = vadd.f32 0.0, %v91
  %v93 = vpop.f32.mrf.mxu0
  %94 = vmatprep.mubr.bf16.mxu0 0
  %95 = vmatmul.mubr.bf16.gmra.mxu0 %v48
  %v96 = vpop.f32.mrf.mxu0
  %v97 = vadd.f32 0.0, %v96
  %v98 = vpop.f32.mrf.mxu0
  %v99 = vpop.f32.mrf.mxu0
  %v100 = vadd.f32 0.0, %v99
  %v101 = vpop.f32.mrf.mxu0
  %102 = vdwg.mxu0
  %v103 = vadd.f32 %v21, %v89
  %v104 = vadd.f32 %v22, %v92
  %v105 = vadd.f32 %v23, %v97
  %v106 = vadd.f32 %v24, %v100
  %vm107 = vcmask 261120
  %108 = vst.msk [vmem:[#allocation2] sm:$0xff] %vm107, %v103
  %109 = vst.msk [vmem:[#allocation2 + $0x8] sm:$0xff] %vm107, %v104
  %110 = vst.msk [vmem:[#allocation2 + $0x10] sm:$0xff] %vm107, %v105
  %111 = vst.msk [vmem:[#allocation2 + $0x18] sm:$0xff] %vm107, %v106
  %p112 = scmp.ne.s32.totalorder 0, 0
  %p113 = pnand %p12, %p112
  %p114 = pneg %p113
  // Predicated region
  $region14: #{loss_fn.3} parent=0 // pred_check
    _
  $region15: #{loss_fn.3} parent=0 // pred_check_branch
    %116 = sbr.rel (%p113) target = $region17
  $region16: #{loss_fn.3} parent=0 // pred_region
    %v117 = vld [vmem:[#allocation2] sm:$0xff]
    %v118 = vld [vmem:[#allocation2 + $0x8] sm:$0xff]
    %v119 = vld [vmem:[#allocation2 + $0x10] sm:$0xff]
    %v120 = vld [vmem:[#allocation2 + $0x18] sm:$0xff]
    %v121 = vmul.f32 %v117, 0.125
    %v122 = vmul.f32 %v118, 0.125
    %v123 = vmul.f32 %v119, 0.125
    %v124 = vmul.f32 %v120, 0.125
    %v125 = vmul.f32 %v121, %v121
    %v126 = vmul.f32 %v122, %v122
    %v127 = vmul.f32 %v123, %v123
    %v128 = vmul.f32 %v124, %v124
    %v129 = vsel %vm107, %v125, 0.0
    %v130 = vsel %vm107, %v126, 0.0
    %v131 = vadd.f32 %v129, %v130
    %v132 = vsel %vm107, %v127, 0.0
    %v133 = vadd.f32 %v131, %v132
    %v134 = vsel %vm107, %v128, 0.0
    %v135 = vadd.f32 %v133, %v134
    %136 = vadd.xlane.f32.xlu0 %v135
    %v137 = vpop.xlane.xlu0 %136
    %v138 = vrot.slane %v137, 4
    %v139 = vadd.f32 %v137, %v138
    %v140 = vrot.slane %v139, 2
    %v141 = vadd.f32 %v139, %v140
    %v142 = vrot.slane %v141, 1
    %v143 = vadd.f32 %v141, %v142
    %s144 = vtos %v143
    %v145 = vstv %s144
    %v146 = vmul.f32 %v145, 0.005
    %v147 = vmul.f32 %v146, 3.0517578e-05
    %148 = vst [vmem:[%s2] sm:$0xff] %v147
  $region17: #{loss_fn.3} parent=0 // pred_fallthru
    _
  %p149 = scmp.eq.s32.totalorder 0, 0
  %p150 = pnand %p12, %p149
  %p151 = pneg %p150
  // Predicated region
  $region18: #{loss_fn.3} parent=0 // pred_check
    _
  $region19: #{loss_fn.3} parent=0 // pred_check_branch
    %153 = sbr.rel (%p150) target = $region21
  $region20: #{loss_fn.3} parent=0 // pred_region
    %v154 = vld [vmem:[#allocation2] sm:$0xff]
    %v155 = vld [vmem:[#allocation2 + $0x8] sm:$0xff]
    %v156 = vld [vmem:[#allocation2 + $0x10] sm:$0xff]
    %v157 = vld [vmem:[#allocation2 + $0x18] sm:$0xff]
    %v158 = vmul.f32 %v154, 0.125
    %v159 = vmul.f32 %v155, 0.125
    %v160 = vmul.f32 %v156, 0.125
    %v161 = vmul.f32 %v157, 0.125
    %v162 = vlaneseq
    %v163 = vshrl.u32 %v162, 7
    %v164 = vadd.s32 %v163, 8
    %v165 = vadd.s32 %v163, 16
    %v166 = vadd.s32 %v163, 24
    %v167 = vlaneseq
    %v168 = vand.u32 %v167, 127
    %vm169 = vcmp.eq.s32.totalorder %v163, %v168
    %vm170 = vcmp.eq.s32.totalorder %v164, %v168
    %vm171 = vcmp.eq.s32.totalorder %v165, %v168
    %vm172 = vcmp.eq.s32.totalorder %v166, %v168
    %v173 = vsub.f32 %v158, 1.0
    %v174 = vsub.f32 %v159, 1.0
    %v175 = vsub.f32 %v160, 1.0
    %v176 = vsub.f32 %v161, 1.0
    %v177 = vmul.f32 %v173, %v173
    %v178 = vmul.f32 %v174, %v174
    %v179 = vmul.f32 %v175, %v175
    %v180 = vmul.f32 %v176, %v176
    %v181 = vmul.f32 %v158, 0.005
    %v182 = vmul.f32 %v159, 0.005
    %v183 = vmul.f32 %v160, 0.005
    %v184 = vmul.f32 %v161, 0.005
    %v185 = vmul.f32 %v181, %v158
    %v186 = vmul.f32 %v182, %v159
    %v187 = vmul.f32 %v183, %v160
    %v188 = vmul.f32 %v184, %v161
    %v189 = vsel %vm169, %v177, %v185
    %v190 = vsel %vm170, %v178, %v186
    %v191 = vsel %vm171, %v179, %v187
    %v192 = vsel %vm172, %v180, %v188
    %v193 = vsel %vm107, %v189, 0.0
    %v194 = vsel %vm107, %v190, 0.0
    %v195 = vadd.f32 %v193, %v194
    %v196 = vsel %vm107, %v191, 0.0
    %v197 = vadd.f32 %v195, %v196
    %v198 = vsel %vm107, %v192, 0.0
    %v199 = vadd.f32 %v197, %v198
    %200 = vadd.xlane.f32.xlu0 %v199
    %v201 = vpop.xlane.xlu0 %200
    %v202 = vrot.slane %v201, 4
    %v203 = vadd.f32 %v201, %v202
    %v204 = vrot.slane %v203, 2
    %v205 = vadd.f32 %v203, %v204
    %v206 = vrot.slane %v205, 1
    %v207 = vadd.f32 %v205, %v206
    %s208 = vtos %v207
    %v209 = vstv %s208
    %v210 = vmul.f32 %v209, 3.0517578e-05
    %211 = vst [vmem:[%s2] sm:$0xff] %v210
  $region21: #{loss_fn.3} parent=0 // pred_fallthru
    _
  // Predicated region
  $region22: #{loss_fn.3} parent=0 // pred_check
    _
  $region23: #{loss_fn.3} parent=0 // pred_check_branch
    %213 = sbr.rel (0) target = $region25
  $region24: #{loss_fn.3} parent=0 // pred_region
    _
  $region25: #{loss_fn.3} parent=0 // pred_fallthru
    _
  // Predicated region
  $region26: #{loss_fn.3} parent=0 // pred_check
    _
  $region27: #{loss_fn.3} parent=0 // pred_check_branch
    %215 = sbr.rel (0) target = $region29
  $region28: #{loss_fn.3} parent=0 // pred_region
    _
  $region29: #{loss_fn.3} parent=0 // pred_fallthru
    _

</llo_original>
